<compile_context>
chip_gen: v6e
topology: v6e:2x2x1
jax: 0.10.0
libtpu: 0.0.40
codegen_flags: <defaults>
</compile_context>

<pallas_src>
import jax
import jax.numpy as jnp
from jax.experimental import pallas as pl
from jax.experimental.pallas import tpu as pltpu


def _round_up(x, m):
    return ((x + m - 1) // m) * m


# ---------------------------------------------------------------------------
# Kernel body
# ---------------------------------------------------------------------------
def _mlp_kernel(x_ref, w13_ref, w2t_ref, o_ref, acc_ref):
    """One (row-tile, F-tile) step of the SwiGLU MLP.

    x_ref:   (tm, D)     activations (native dtype, e.g. bf16)
    w13_ref: (D, 2*tf)   fused [gate_f | up_f] weight slice (NN layout)
    w2t_ref: (tf, D)     down-proj slice, pre-transposed to [F, D]
    o_ref:   (tm, D)     output tile (written on the last F step)
    acc_ref: (tm, D)     f32 accumulator scratch
    """
    f = pl.program_id(1)
    nf = pl.num_programs(1)

    x = x_ref[...]

    # Single fused gate/up matmul: (tm, D) @ (D, 2*tf) -> (tm, 2*tf), f32 acc.
    gu = jnp.dot(x, w13_ref[...], preferred_element_type=jnp.float32)
    half = gu.shape[1] // 2                      # == tf, lane-aligned (x128)
    gate = gu[:, :half]
    up = gu[:, half:]

    # SwiGLU in f32 (sigmoid goes to the EUP); one cast back to the MXU dtype.
    h = (gate * jax.nn.sigmoid(gate) * up).astype(w2t_ref.dtype)

    # Partial down-projection: (tm, tf) @ (tf, D) -> (tm, D), plain NN matmul.
    partial = jnp.dot(h, w2t_ref[...], preferred_element_type=jnp.float32)

    @pl.when(f == 0)
    def _():
        acc_ref[...] = partial        # direct write: no zero-init + RMW pass

    @pl.when(f > 0)
    def _():
        acc_ref[...] += partial

    @pl.when(f == nf - 1)
    def _():
        o_ref[...] = acc_ref[...].astype(o_ref.dtype)


# ---------------------------------------------------------------------------
# Generation-aware tiling
# ---------------------------------------------------------------------------
def _device_info():
    try:
        kind = jax.devices()[0].device_kind
    except Exception:  # pragma: no cover
        kind = ""
    vmem = None
    try:
        vmem = int(pltpu.get_tpu_info().vmem_capacity_bytes)
    except Exception:
        vmem = None
    if not vmem:
        k = kind.lower()
        # Conservative fallback: only assume 128 MiB on known 128-MiB chips.
        vmem = (128 << 20) if ("v4" in k or "v5" in k or "v6" in k) else (64 << 20)
    return vmem, kind


def _vmem_budget(vmem_cap):
    # ~108 MiB on 128-MiB chips (v5e/v6e), ~54 MiB on 64-MiB chips (v7x).
    return min(int(vmem_cap * 0.85), vmem_cap - (8 << 20))


def _choose_tm(M, kind):
    k = kind.lower()
    # Weight-streaming intensity of this grid is exactly tm FLOPs/byte:
    # v6e needs ~650 to be MXU-bound -> tm=512 for prefill; v5e (~240) and
    # v7x (~310 per TC) are already near the compute roofline at 256.
    cap = 512 if ("v6" in k and M >= 512) else 256
    tm = min(cap, _round_up(max(M, 1), 16))
    if "v7" in k:
        # Megacore: keep >= 2 row tiles so both TensorCores get work.
        while tm > 128 and pl.cdiv(M, tm) < 2:
            tm //= 2
    return tm


def _choose_tf(D, F, tm_worst, w_bytes, budget):
    """Largest 128-multiple F tile whose streamed weights + resident blocks fit."""
    cands = [c for c in (1024, 512, 256, 128) if F % c == 0]
    if not cands:
        return F  # small / ragged F: full-extent block is always legal
    # x + out (double-buffered) + f32 accumulator, at the worst-case row tile.
    resident = 2 * 2 * tm_worst * D * w_bytes + tm_worst * D * 4
    for c in cands:                               # largest first
        streamed = 2 * 3 * c * D * w_bytes        # w13 (D,2c) + w2t (c,D), x2 bufs
        if streamed + resident <= budget:
            return c
    return cands[-1]


# ---------------------------------------------------------------------------
# One-time weight layout prep (load time, outside the per-call path)
# ---------------------------------------------------------------------------
def _prepare_weights(w1, w2, w3, tf):
    """w1, w3: [F, D]; w2: [D, F] (PyTorch nn.Linear layouts).

    Returns:
      w13: [D, 2F] where column tile f (width 2*tf) = [gate tile f | up tile f]
      w2t: [F, D]  contiguous rows for the streamed down-projection.
    """
    F, D = w1.shape
    nF = F // tf
    w1t = jnp.transpose(w1)                       # (D, F)
    w3t = jnp.transpose(w3)                       # (D, F)
    w13 = jnp.concatenate(
        [w1t.reshape(D, nF, tf), w3t.reshape(D, nF, tf)], axis=2
    ).reshape(D, 2 * F)
    w2t = jnp.transpose(w2)                       # (F, D)
    return w13, w2t


# ---------------------------------------------------------------------------
# Public entry points
# ---------------------------------------------------------------------------
def make_llama_mlp(w1, w2, w3):
    """Build a jitted Pallas SwiGLU MLP; weight re-layout happens once here."""
    F, D = w1.shape
    assert w3.shape == (F, D) and w2.shape == (D, F)

    w_bytes = jnp.dtype(w1.dtype).itemsize
    vmem_cap, kind = _device_info()
    budget = _vmem_budget(vmem_cap)
    vmem_limit = int(min(budget + (8 << 20), vmem_cap - (2 << 20)))

    # Pick tf against the largest row tile we would ever use (worst-case VMEM).
    tm_worst = 512 if "v6" in kind.lower() else 256
    tf = _choose_tf(D, F, tm_worst, w_bytes, budget)
    nf = F // tf if F % tf == 0 else 1

    # One-time layout prep (device ops), kept out of the per-call jit path.
    w13, w2t = _prepare_weights(w1, w2, w3, tf)

    @jax.jit
    def _apply(x, w13, w2t):
        B, S, _ = x.shape
        M = B * S
        tm = _choose_tm(M, kind)
        Mp = _round_up(M, tm)

        x2d = x.reshape(M, D)
        if Mp != M:
            x2d = jnp.pad(x2d, ((0, Mp - M), (0, 0)))

        grid = (Mp // tm, nf)

        cost = pl.CostEstimate(
            flops=6 * Mp * D * F,
            transcendentals=Mp * F,
            bytes_accessed=(2 * Mp * D * jnp.dtype(x.dtype).itemsize
                            + 3 * D * F * w_bytes * grid[0]),
        )

        out2d = pl.pallas_call(
            _mlp_kernel,
            out_shape=jax.ShapeDtypeStruct((Mp, D), x.dtype),
            grid_spec=pltpu.PrefetchScalarGridSpec(
                num_scalar_prefetch=0,
                grid=grid,
                in_specs=[
                    pl.BlockSpec((tm, D), lambda i, f: (i, 0)),      # x rows
                    pl.BlockSpec((D, 2 * tf), lambda i, f: (0, f)),  # fused gate/up
                    pl.BlockSpec((tf, D), lambda i, f: (f, 0)),      # down-proj rows
                ],
                out_specs=pl.BlockSpec((tm, D), lambda i, f: (i, 0)),
                scratch_shapes=[pltpu.VMEM((tm, D), jnp.float32)],
            ),
            compiler_params=pltpu.CompilerParams(
                dimension_semantics=("parallel", "arbitrary"),
                vmem_limit_bytes=vmem_limit),
            cost_estimate=cost,
        )(x2d, w13, w2t)

        if Mp != M:
            out2d = out2d[:M]
        return out2d.reshape(B, S, D)

    def apply(x):
        return _apply(x, w13, w2t)

    return apply


def llama_mlp_pallas(x, w1, w2, w3):
    """One-shot convenience wrapper (weight prep included)."""
    return make_llama_mlp(w1, w2, w3)(x)


def llama_mlp_ref(x, w1, w2, w3):
    """Pure-JAX reference of Llama feed_forward (f32)."""
    gate = jnp.einsum("bsd,fd->bsf", x, w1)
    up = jnp.einsum("bsd,fd->bsf", x, w3)
    h = jax.nn.silu(gate) * up
    return jnp.einsum("bsf,df->bsd", h, w2)


if __name__ == "__main__":
    # Small deterministic synthetic config (Llama2-70B uses D=8192, F=28672;
    # scaled down here but kept at TPU-friendly multiples of 128).
    B, S, D, F = 2, 8, 128, 256

    key = jax.random.PRNGKey(0)
    kx, k1, k2, k3 = jax.random.split(key, 4)

    dtype = jnp.bfloat16
    x = jax.random.normal(kx, (B, S, D), jnp.float32).astype(dtype)
    # PyTorch nn.Linear weight shapes: w1/w3: [F, D], w2: [D, F]
    w1 = (jax.random.normal(k1, (F, D), jnp.float32) * (1.0 / D) ** 0.5).astype(dtype)
    w3 = (jax.random.normal(k3, (F, D), jnp.float32) * (1.0 / D) ** 0.5).astype(dtype)
    w2 = (jax.random.normal(k2, (D, F), jnp.float32) * (1.0 / F) ** 0.5).astype(dtype)

    mlp = make_llama_mlp(w1, w2, w3)   # weight re-layout happens once here
    out = mlp(x)
    jax.block_until_ready(out)

    ref = llama_mlp_ref(x.astype(jnp.float32), w1.astype(jnp.float32),
                        w2.astype(jnp.float32), w3.astype(jnp.float32))
    assert out.shape == (B, S, D)
    assert jnp.allclose(out.astype(jnp.float32), ref, atol=5e-2, rtol=5e-2), \
        "mismatch vs reference"

    print("KERNEL_OK")
</pallas_src>

<mosaic_0001>
module attributes {stable_mosaic.version = 11 : i64} {
  func.func @_mlp_kernel(%arg0: i32, %arg1: i32, %arg2: memref<16x128xbf16, #tpu.memory_space<vmem>>, %arg3: memref<128x512xbf16, #tpu.memory_space<vmem>>, %arg4: memref<256x128xbf16, #tpu.memory_space<vmem>>, %arg5: memref<16x128xbf16, #tpu.memory_space<vmem>>, %arg6: memref<16x128xf32, #tpu.memory_space<vmem>>) attributes {dimension_semantics = [#tpu.dimension_semantics<parallel>, #tpu.dimension_semantics<arbitrary>], iteration_bounds = array<i64: 1, 1>, scalar_prefetch = 0 : i64, scratch_operands = 1 : i64, tpu.core_type = #tpu.core_type<tc>, window_params = [{transform_indices = @transform_0, window_bounds = array<i64: 16, 128>}, {transform_indices = @transform_1, window_bounds = array<i64: 128, 512>}, {transform_indices = @transform_2, window_bounds = array<i64: 256, 128>}, {transform_indices = @transform_3, window_bounds = array<i64: 16, 128>}]} {
    %c0 = arith.constant 0 : index
    %c0_0 = arith.constant 0 : index
    %0 = vector.load %arg2[%c0, %c0_0] : memref<16x128xbf16, #tpu.memory_space<vmem>>, vector<16x128xbf16>
    %c0_1 = arith.constant 0 : index
    %c0_2 = arith.constant 0 : index
    %1 = vector.load %arg3[%c0_1, %c0_2] : memref<128x512xbf16, #tpu.memory_space<vmem>>, vector<128x512xbf16>
    %cst = arith.constant dense<0.000000e+00> : vector<16x512xf32>
    %2 = tpu.matmul %0, %1, %cst {dimension_numbers = #tpu.dot_dimension_numbers<[1], [0], [0], [1], [0, 0, 1, 1], [], []>} : vector<16x128xbf16>, vector<128x512xbf16>, vector<16x512xf32> -> vector<16x512xf32>
    %3 = vector.extract_strided_slice %2 {offsets = [0, 0], sizes = [16, 256], strides = [1, 1]} : vector<16x512xf32> to vector<16x256xf32>
    %4 = vector.extract_strided_slice %2 {offsets = [0, 256], sizes = [16, 256], strides = [1, 1]} : vector<16x512xf32> to vector<16x256xf32>
    %5 = arith.negf %3 : vector<16x256xf32>
    %6 = math.exp %5 : vector<16x256xf32>
    %cst_3 = arith.constant 1.000000e+00 : f32
    %7 = vector.broadcast %cst_3 : f32 to vector<16x256xf32>
    %8 = arith.addf %7, %6 : vector<16x256xf32>
    %9 = arith.divf %7, %8 : vector<16x256xf32>
    %10 = arith.mulf %3, %9 : vector<16x256xf32>
    %11 = arith.mulf %10, %4 : vector<16x256xf32>
    %12 = arith.truncf %11 : vector<16x256xf32> to vector<16x256xbf16>
    %c0_4 = arith.constant 0 : index
    %c0_5 = arith.constant 0 : index
    %13 = vector.load %arg4[%c0_4, %c0_5] : memref<256x128xbf16, #tpu.memory_space<vmem>>, vector<256x128xbf16>
    %cst_6 = arith.constant dense<0.000000e+00> : vector<16x128xf32>
    %14 = tpu.matmul %12, %13, %cst_6 {dimension_numbers = #tpu.dot_dimension_numbers<[1], [0], [0], [1], [0, 0, 1, 1], [], []>} : vector<16x256xbf16>, vector<256x128xbf16>, vector<16x128xf32> -> vector<16x128xf32>
    %c0_i32 = arith.constant 0 : i32
    %15 = arith.cmpi eq, %arg1, %c0_i32 : i32
    %16 = arith.extui %15 : i1 to i32
    %c0_i32_7 = arith.constant 0 : i32
    %17 = arith.cmpi ne, %16, %c0_i32_7 : i32
    scf.if %17 {
      %c0_12 = arith.constant 0 : index
      %c0_13 = arith.constant 0 : index
      %24 = vector.load %arg6[%c0_12, %c0_13] : memref<16x128xf32, #tpu.memory_space<vmem>>, vector<16x128xf32>
      tpu.vector_store %arg6[%c0_12, %c0_13], %14 {strides = array<i32>} : memref<16x128xf32, #tpu.memory_space<vmem>>, vector<16x128xf32>,
    } else {
    }
    %c0_i32_8 = arith.constant 0 : i32
    %18 = arith.cmpi sgt, %arg1, %c0_i32_8 : i32
    %19 = arith.extui %18 : i1 to i32
    %c0_i32_9 = arith.constant 0 : i32
    %20 = arith.cmpi ne, %19, %c0_i32_9 : i32
    scf.if %20 {
      %c0_12 = arith.constant 0 : index
      %c0_13 = arith.constant 0 : index
      %24 = vector.load %arg6[%c0_12, %c0_13] : memref<16x128xf32, #tpu.memory_space<vmem>>, vector<16x128xf32>
      %25 = arith.addf %24, %14 : vector<16x128xf32>
      %c0_14 = arith.constant 0 : index
      %c0_15 = arith.constant 0 : index
      %26 = vector.load %arg6[%c0_14, %c0_15] : memref<16x128xf32, #tpu.memory_space<vmem>>, vector<16x128xf32>
      tpu.vector_store %arg6[%c0_14, %c0_15], %25 {strides = array<i32>} : memref<16x128xf32, #tpu.memory_space<vmem>>, vector<16x128xf32>,
    } else {
    }
    %c0_i32_10 = arith.constant 0 : i32
    %21 = arith.cmpi eq, %arg1, %c0_i32_10 : i32
    %22 = arith.extui %21 : i1 to i32
    %c0_i32_11 = arith.constant 0 : i32
    %23 = arith.cmpi ne, %22, %c0_i32_11 : i32
    scf.if %23 {
      %c0_12 = arith.constant 0 : index
      %c0_13 = arith.constant 0 : index
      %24 = vector.load %arg6[%c0_12, %c0_13] : memref<16x128xf32, #tpu.memory_space<vmem>>, vector<16x128xf32>
      %25 = arith.truncf %24 : vector<16x128xf32> to vector<16x128xbf16>
      %c0_14 = arith.constant 0 : index
      %c0_15 = arith.constant 0 : index
      %26 = vector.load %arg5[%c0_14, %c0_15] : memref<16x128xbf16, #tpu.memory_space<vmem>>, vector<16x128xbf16>
      tpu.vector_store %arg5[%c0_14, %c0_15], %25 {strides = array<i32>} : memref<16x128xbf16, #tpu.memory_space<vmem>>, vector<16x128xbf16>,
    } else {
    }
    return
  }
  func.func @transform_0(%arg0: i32, %arg1: i32) -> (i32, i32) {
    %c0_i32 = arith.constant 0 : i32
    %c0_i32_0 = arith.constant 0 : i32
    return %arg0, %c0_i32 : i32, i32
  }
  func.func @transform_1(%arg0: i32, %arg1: i32) -> (i32, i32) {
    %c0_i32 = arith.constant 0 : i32
    %c0_i32_0 = arith.constant 0 : i32
    return %c0_i32, %arg1 : i32, i32
  }
  func.func @transform_2(%arg0: i32, %arg1: i32) -> (i32, i32) {
    %c0_i32 = arith.constant 0 : i32
    %c0_i32_0 = arith.constant 0 : i32
    return %arg1, %c0_i32 : i32, i32
  }
  func.func @transform_3(%arg0: i32, %arg1: i32) -> (i32, i32) {
    %c0_i32 = arith.constant 0 : i32
    %c0_i32_0 = arith.constant 0 : i32
    return %arg0, %c0_i32 : i32, i32
  }
}

</mosaic_0001>

<llo_original>
// kernel: _apply.1
$region0: #{_apply.1}
  #allocation0 [shape = 'u32[]', space=smem, size = 0x4, offset = 0x4, fixed_abs, tag = 'smem constant byte address 0x4 - core index']
  #allocation1 [shape = 'u32[144,128]{1,0:T(1,128)}', space=vmem, size = 0x12000, scoped, tag = 'internal scratch']
  #allocation2 [shape = 'f32[16,128]{1,0:T(8,128)}', space=vmem, size = 0x2000, scoped, tag = 'scratch operand']
  %s0 = inlined_call_operand.hbm [shape: bf16[16,128], index: 0, kind: input, shape index: {}]
  %s1 = inlined_call_operand.hbm [shape: bf16[128,512], index: 1, kind: input, shape index: {}]
  %s2 = inlined_call_operand.hbm [shape: bf16[256,128], index: 2, kind: input, shape index: {}]
  %s3 = inlined_call_operand.hbm [shape: bf16[16,128], index: 3, kind: output, shape index: {}]
  %s4 = sld [smem:[#allocation0]]
  $region46: #{_apply.1} parent=0
    _
  %s6 = ssub.s32 1, %s4
  %s7 = scalar_select 0, %s6, %s4
  $region1: #{_apply.1} parent=0
    #allocation3 [shape = 'u8[4096]{0}', space=vmem, size = 0x1000, scoped, tag = 'input window, operand 0, single buffered']
    #allocation4 [shape = 's32[1]{0}', space=sflag, size = 0x4, scoped, tag = 'scoped memory for _apply.1']
    #allocation5 [shape = 's32[1]{0}', space=sflag, size = 0x4, scoped, tag = 'scoped memory for _apply.1']
    #allocation6 [shape = 'u8[131072]{0}', space=vmem, size = 0x20000, scoped, tag = 'input window, operand 1, single buffered']
    #allocation7 [shape = 's32[1]{0}', space=sflag, size = 0x4, scoped, tag = 'scoped memory for _apply.1']
    #allocation8 [shape = 'u8[65536]{0}', space=vmem, size = 0x10000, scoped, tag = 'input window, operand 2, single buffered']
    #allocation9 [shape = 'u8[4096]{0}', space=vmem, size = 0x1000, scoped, tag = 'output window, operand 0, single buffered']
    %8 = vsyncpa [#allocation4], 0
    %9 = vsyncpa [#allocation7], 0
    %10 = vsyncpa [#allocation5], 0
    // Predicated region
    $region2: #{_apply.1} parent=1 // pred_check
      _
    $region3: #{_apply.1} parent=1 // pred_check_branch
      %12 = sbr.rel (0) target = $region5
    $region4: #{_apply.1} parent=1 // pred_region
      %s14 = ssub.s32 128, 128
      %15 = vsyncadd [#allocation4], %s14
      %s16 = sshll.u32 [#allocation3], 4
      %s17 = int_to_ptr.vmem [resolvable:$true] %s16
      %22 = dma.hbm_to_vmem [thread:$0]  %s0, 128, %s17, [#allocation4], 64, 64, 4
    $region5: #{_apply.1} parent=1 // pred_fallthru
      _
    // Predicated region
    $region6: #{_apply.1} parent=1 // pred_check
      _
    $region7: #{_apply.1} parent=1 // pred_check_branch
      %24 = sbr.rel (0) target = $region9
    $region8: #{_apply.1} parent=1 // pred_region
      %s26 = ssub.s32 4096, 4096
      %27 = vsyncadd [#allocation7], %s26
      %s28 = sshll.u32 [#allocation6], 4
      %s29 = int_to_ptr.vmem [resolvable:$true] %s28
      %34 = dma.hbm_to_vmem [thread:$0]  %s1, 4096, %s29, [#allocation7], 256, 256, 16
    $region9: #{_apply.1} parent=1 // pred_fallthru
      _
    // Predicated region
    $region10: #{_apply.1} parent=1 // pred_check
      _
    $region11: #{_apply.1} parent=1 // pred_check_branch
      %36 = sbr.rel (0) target = $region13
    $region12: #{_apply.1} parent=1 // pred_region
      %s38 = ssub.s32 2048, 2048
      %39 = vsyncadd [#allocation7], %s38
      %s40 = sshll.u32 [#allocation8], 4
      %s41 = int_to_ptr.vmem [resolvable:$true] %s40
      %46 = dma.hbm_to_vmem [thread:$0]  %s2, 2048, %s41, [#allocation7], 64, 64, 4
    $region13: #{_apply.1} parent=1 // pred_fallthru
      _
    // Predicated region
    $region14: #{_apply.1} parent=1 // pred_check
      _
    $region15: #{_apply.1} parent=1 // pred_check_branch
      %48 = sbr.rel (0) target = $region17
    $region16: #{_apply.1} parent=1 // pred_region
      %49 = dma.done [#allocation4], 128
    $region17: #{_apply.1} parent=1 // pred_fallthru
      _
    // Predicated region
    $region18: #{_apply.1} parent=1 // pred_check
      _
    $region19: #{_apply.1} parent=1 // pred_check_branch
      %51 = sbr.rel (0) target = $region21
    $region20: #{_apply.1} parent=1 // pred_region
      %52 = dma.done [#allocation7], 4096
    $region21: #{_apply.1} parent=1 // pred_fallthru
      _
    // Predicated region
    $region22: #{_apply.1} parent=1 // pred_check
      _
    $region23: #{_apply.1} parent=1 // pred_check_branch
      %54 = sbr.rel (0) target = $region25
    $region24: #{_apply.1} parent=1 // pred_region
      %55 = dma.done [#allocation7], 2048
    $region25: #{_apply.1} parent=1 // pred_fallthru
      _
    %v57 = vld [vmem:[#allocation3] sm:$0xf]
    %v58 = vld [vmem:[#allocation3 + $0x4] sm:$0xf]
    %v59 = vld [vmem:[#allocation6] sm:$0xff]
    %v60 = vld [vmem:[#allocation6 + $0x8] sm:$0xff]
    %v61 = vld [vmem:[#allocation6 + $0x10] sm:$0xff]
    %v62 = vld [vmem:[#allocation6 + $0x18] sm:$0xff]
    %v63 = vld [vmem:[#allocation6 + $0x20] sm:$0xff]
    %v64 = vld [vmem:[#allocation6 + $0x28] sm:$0xff]
    %v65 = vld [vmem:[#allocation6 + $0x30] sm:$0xff]
    %v66 = vld [vmem:[#allocation6 + $0x38] sm:$0xff]
    %v67 = vld [vmem:[#allocation6 + $0x40] sm:$0xff]
    %v68 = vld [vmem:[#allocation6 + $0x48] sm:$0xff]
    %v69 = vld [vmem:[#allocation6 + $0x50] sm:$0xff]
    %v70 = vld [vmem:[#allocation6 + $0x58] sm:$0xff]
    %v71 = vld [vmem:[#allocation6 + $0x60] sm:$0xff]
    %v72 = vld [vmem:[#allocation6 + $0x68] sm:$0xff]
    %v73 = vld [vmem:[#allocation6 + $0x70] sm:$0xff]
    %v74 = vld [vmem:[#allocation6 + $0x78] sm:$0xff]
    %v75 = vld [vmem:[#allocation6 + $0x80] sm:$0xff]
    %v76 = vld [vmem:[#allocation6 + $0x88] sm:$0xff]
    %v77 = vld [vmem:[#allocation6 + $0x90] sm:$0xff]
    %v78 = vld [vmem:[#allocation6 + $0x98] sm:$0xff]
    %v79 = vld [vmem:[#allocation6 + $0xa0] sm:$0xff]
    %v80 = vld [vmem:[#allocation6 + $0xa8] sm:$0xff]
    %v81 = vld [vmem:[#allocation6 + $0xb0] sm:$0xff]
    %v82 = vld [vmem:[#allocation6 + $0xb8] sm:$0xff]
    %v83 = vld [vmem:[#allocation6 + $0xc0] sm:$0xff]
    %v84 = vld [vmem:[#allocation6 + $0xc8] sm:$0xff]
    %v85 = vld [vmem:[#allocation6 + $0xd0] sm:$0xff]
    %v86 = vld [vmem:[#allocation6 + $0xd8] sm:$0xff]
    %v87 = vld [vmem:[#allocation6 + $0xe0] sm:$0xff]
    %v88 = vld [vmem:[#allocation6 + $0xe8] sm:$0xff]
    %v89 = vld [vmem:[#allocation6 + $0xf0] sm:$0xff]
    %v90 = vld [vmem:[#allocation6 + $0xf8] sm:$0xff]
    %v93 = vunpack.c.l.b16 %v57
    %v94 = vunpack.c.l.b16 %v58
    %v95 = vpack.c.b16 %v94, %v93
    %v129 = vunpack.c.l.b16 %v59
    %v130 = vunpack.c.h.b16 %v59
    %v131 = vunpack.c.l.b16 %v60
    %v132 = vunpack.c.h.b16 %v60
    %v133 = vunpack.c.l.b16 %v61
    %v134 = vunpack.c.h.b16 %v61
    %v135 = vunpack.c.l.b16 %v62
    %v136 = vunpack.c.h.b16 %v62
    %v137 = vunpack.c.l.b16 %v63
    %v138 = vunpack.c.h.b16 %v63
    %v139 = vunpack.c.l.b16 %v64
    %v140 = vunpack.c.h.b16 %v64
    %v141 = vunpack.c.l.b16 %v65
    %v142 = vunpack.c.h.b16 %v65
    %v143 = vunpack.c.l.b16 %v66
    %v144 = vunpack.c.h.b16 %v66
    %v145 = vunpack.c.l.b16 %v67
    %v146 = vunpack.c.h.b16 %v67
    %v147 = vunpack.c.l.b16 %v68
    %v148 = vunpack.c.h.b16 %v68
    %v149 = vunpack.c.l.b16 %v69
    %v150 = vunpack.c.h.b16 %v69
    %v151 = vunpack.c.l.b16 %v70
    %v152 = vunpack.c.h.b16 %v70
    %v153 = vunpack.c.l.b16 %v71
    %v154 = vunpack.c.h.b16 %v71
    %v155 = vunpack.c.l.b16 %v72
    %v156 = vunpack.c.h.b16 %v72
    %v157 = vunpack.c.l.b16 %v73
    %v158 = vunpack.c.h.b16 %v73
    %v159 = vunpack.c.l.b16 %v74
    %v160 = vunpack.c.h.b16 %v74
    %v161 = vunpack.c.l.b16 %v75
    %v162 = vunpack.c.h.b16 %v75
    %v163 = vunpack.c.l.b16 %v76
    %v164 = vunpack.c.h.b16 %v76
    %v165 = vunpack.c.l.b16 %v77
    %v166 = vunpack.c.h.b16 %v77
    %v167 = vunpack.c.l.b16 %v78
    %v168 = vunpack.c.h.b16 %v78
    %v169 = vunpack.c.l.b16 %v79
    %v170 = vunpack.c.h.b16 %v79
    %v171 = vunpack.c.l.b16 %v80
    %v172 = vunpack.c.h.b16 %v80
    %v173 = vunpack.c.l.b16 %v81
    %v174 = vunpack.c.h.b16 %v81
    %v175 = vunpack.c.l.b16 %v82
    %v176 = vunpack.c.h.b16 %v82
    %v177 = vunpack.c.l.b16 %v83
    %v178 = vunpack.c.h.b16 %v83
    %v179 = vunpack.c.l.b16 %v84
    %v180 = vunpack.c.h.b16 %v84
    %v181 = vunpack.c.l.b16 %v85
    %v182 = vunpack.c.h.b16 %v85
    %v183 = vunpack.c.l.b16 %v86
    %v184 = vunpack.c.h.b16 %v86
    %v185 = vunpack.c.l.b16 %v87
    %v186 = vunpack.c.h.b16 %v87
    %v187 = vunpack.c.l.b16 %v88
    %v188 = vunpack.c.h.b16 %v88
    %v189 = vunpack.c.l.b16 %v89
    %v190 = vunpack.c.h.b16 %v89
    %v191 = vunpack.c.l.b16 %v90
    %v192 = vunpack.c.h.b16 %v90
    %v193 = vpack.c.b16 %v133, %v129
    %v194 = vpack.c.b16 %v134, %v130
    %v195 = vpack.c.b16 %v135, %v131
    %v196 = vpack.c.b16 %v136, %v132
    %v197 = vpack.c.b16 %v141, %v137
    %v198 = vpack.c.b16 %v142, %v138
    %v199 = vpack.c.b16 %v143, %v139
    %v200 = vpack.c.b16 %v144, %v140
    %v201 = vpack.c.b16 %v149, %v145
    %v202 = vpack.c.b16 %v150, %v146
    %v203 = vpack.c.b16 %v151, %v147
    %v204 = vpack.c.b16 %v152, %v148
    %v205 = vpack.c.b16 %v157, %v153
    %v206 = vpack.c.b16 %v158, %v154
    %v207 = vpack.c.b16 %v159, %v155
    %v208 = vpack.c.b16 %v160, %v156
    %v209 = vpack.c.b16 %v165, %v161
    %v210 = vpack.c.b16 %v166, %v162
    %v211 = vpack.c.b16 %v167, %v163
    %v212 = vpack.c.b16 %v168, %v164
    %v213 = vpack.c.b16 %v173, %v169
    %v214 = vpack.c.b16 %v174, %v170
    %v215 = vpack.c.b16 %v175, %v171
    %v216 = vpack.c.b16 %v176, %v172
    %v217 = vpack.c.b16 %v181, %v177
    %v218 = vpack.c.b16 %v182, %v178
    %v219 = vpack.c.b16 %v183, %v179
    %v220 = vpack.c.b16 %v184, %v180
    %v221 = vpack.c.b16 %v189, %v185
    %v222 = vpack.c.b16 %v190, %v186
    %v223 = vpack.c.b16 %v191, %v187
    %v224 = vpack.c.b16 %v192, %v188
    %257 = vmatprep.subr.bf16.mxu0 %v222
    %258 = vmatpush1.bf16.msra.mxu0 %v221
    %259 = vmatprep.subr.bf16.mxu0 %v218
    %260 = vmatpush1.bf16.msra.mxu0 %v217
    %261 = vmatprep.subr.bf16.mxu0 %v214
    %262 = vmatpush1.bf16.msra.mxu0 %v213
    %263 = vmatprep.subr.bf16.mxu0 %v210
    %264 = vmatpush1.bf16.msra.mxu0 %v209
    %265 = vmatprep.subr.bf16.mxu0 %v206
    %266 = vmatpush1.bf16.msra.mxu0 %v205
    %267 = vmatprep.subr.bf16.mxu0 %v202
    %268 = vmatpush1.bf16.msra.mxu0 %v201
    %269 = vmatprep.subr.bf16.mxu0 %v198
    %270 = vmatpush1.bf16.msra.mxu0 %v197
    %271 = vmatprep.subr.bf16.mxu0 %v194
    %272 = vmatpush1.bf16.msra.mxu0 %v193
    %273 = vmatprep.subr.bf16.mxu0 0
    %274 = vmatpush2.bf16.msra.mxu0 0
    %275 = vmatprep.subr.bf16.mxu0 0
    %276 = vmatpush2.bf16.msra.mxu0 0
    %277 = vmatprep.subr.bf16.mxu0 0
    %278 = vmatpush2.bf16.msra.mxu0 0
    %279 = vmatprep.subr.bf16.mxu0 0
    %280 = vmatpush2.bf16.msra.mxu0 0
    %281 = vmatprep.subr.bf16.mxu0 0
    %282 = vmatpush2.bf16.msra.mxu0 0
    %283 = vmatprep.subr.bf16.mxu0 0
    %284 = vmatpush2.bf16.msra.mxu0 0
    %285 = vmatprep.subr.bf16.mxu0 0
    %286 = vmatpush2.bf16.msra.mxu0 0
    %287 = vmatprep.subr.bf16.mxu0 0
    %288 = vmatpush2.bf16.msra.mxu0 0
    %289 = vmatprep.mubr.bf16.mxu0 0
    %290 = vmatmul.mubr.bf16.gmra.mxu0 %v95
    %v291 = vpop.f32.mrf.mxu0
    %v292 = vadd.f32 0.0, %v291
    %v293 = vpop.f32.mrf.mxu0
    %v294 = vadd.f32 0.0, %v293
    %v295 = vpop.f32.mrf.mxu0
    %v296 = vadd.f32 0.0, %v295
    %v297 = vpop.f32.mrf.mxu0
    %v298 = vadd.f32 0.0, %v297
    %299 = vdwg.mxu0
    %300 = vmatprep.subr.bf16.mxu0 %v224
    %301 = vmatpush1.bf16.msra.mxu0 %v223
    %302 = vmatprep.subr.bf16.mxu0 %v220
    %303 = vmatpush1.bf16.msra.mxu0 %v219
    %304 = vmatprep.subr.bf16.mxu0 %v216
    %305 = vmatpush1.bf16.msra.mxu0 %v215
    %306 = vmatprep.subr.bf16.mxu0 %v212
    %307 = vmatpush1.bf16.msra.mxu0 %v211
    %308 = vmatprep.subr.bf16.mxu0 %v208
    %309 = vmatpush1.bf16.msra.mxu0 %v207
    %310 = vmatprep.subr.bf16.mxu0 %v204
    %311 = vmatpush1.bf16.msra.mxu0 %v203
    %312 = vmatprep.subr.bf16.mxu0 %v200
    %313 = vmatpush1.bf16.msra.mxu0 %v199
    %314 = vmatprep.subr.bf16.mxu0 %v196
    %315 = vmatpush1.bf16.msra.mxu0 %v195
    %316 = vmatprep.subr.bf16.mxu0 0
    %317 = vmatpush2.bf16.msra.mxu0 0
    %318 = vmatprep.subr.bf16.mxu0 0
    %319 = vmatpush2.bf16.msra.mxu0 0
    %320 = vmatprep.subr.bf16.mxu0 0
    %321 = vmatpush2.bf16.msra.mxu0 0
    %322 = vmatprep.subr.bf16.mxu0 0
    %323 = vmatpush2.bf16.msra.mxu0 0
    %324 = vmatprep.subr.bf16.mxu0 0
    %325 = vmatpush2.bf16.msra.mxu0 0
    %326 = vmatprep.subr.bf16.mxu0 0
    %327 = vmatpush2.bf16.msra.mxu0 0
    %328 = vmatprep.subr.bf16.mxu0 0
    %329 = vmatpush2.bf16.msra.mxu0 0
    %330 = vmatprep.subr.bf16.mxu0 0
    %331 = vmatpush2.bf16.msra.mxu0 0
    %332 = vmatprep.mubr.bf16.mxu0 0
    %333 = vmatmul.mubr.bf16.gmra.mxu0 %v95
    %v334 = vpop.f32.mrf.mxu0
    %v335 = vadd.f32 0.0, %v334
    %v336 = vpop.f32.mrf.mxu0
    %v337 = vadd.f32 0.0, %v336
    %v338 = vpop.f32.mrf.mxu0
    %v339 = vadd.f32 0.0, %v338
    %v340 = vpop.f32.mrf.mxu0
    %v341 = vadd.f32 0.0, %v340
    %342 = vdwg.mxu0
    %v343 = vxor.u32 %v292, 2147483648
    %v344 = vxor.u32 %v294, 2147483648
    %v345 = vxor.u32 %v296, 2147483648
    %v346 = vxor.u32 %v298, 2147483648
    %v347 = vmul.f32 %v343, 1.442695
    %v348 = vpow.pop %v347
    %v349 = vmul.f32 %v344, 1.442695
    %v350 = vpow.pop %v349
    %v351 = vmul.f32 %v345, 1.442695
    %v352 = vpow.pop %v351
    %v353 = vmul.f32 %v346, 1.442695
    %v354 = vpow.pop %v353
    %v355 = vadd.f32 %v348, 1.0
    %v356 = vadd.f32 %v350, 1.0
    %v357 = vadd.f32 %v352, 1.0
    %v358 = vadd.f32 %v354, 1.0
    %v359 = vrcp.pop %v355
    %v360 = vmul.f32 1.0, %v359
    %v361 = vrcp.pop %v356
    %v362 = vmul.f32 1.0, %v361
    %v363 = vrcp.pop %v357
    %v364 = vmul.f32 1.0, %v363
    %v365 = vrcp.pop %v358
    %v366 = vmul.f32 1.0, %v365
    %v367 = vmul.f32 %v292, %v360
    %v368 = vmul.f32 %v294, %v362
    %v369 = vmul.f32 %v296, %v364
    %v370 = vmul.f32 %v298, %v366
    %v371 = vmul.f32 %v367, %v335
    %v372 = vmul.f32 %v368, %v337
    %v373 = vmul.f32 %v369, %v339
    %v374 = vmul.f32 %v370, %v341
    %v375 = vpack.c.bf16 %v373, %v371
    %v376 = vpack.c.bf16 %v374, %v372
    %v377 = vld [vmem:[#allocation8] sm:$0xf]
    %v378 = vld [vmem:[#allocation8 + $0x4] sm:$0xf]
    %v379 = vld [vmem:[#allocation8 + $0x8] sm:$0xf]
    %v380 = vld [vmem:[#allocation8 + $0xc] sm:$0xf]
    %v381 = vld [vmem:[#allocation8 + $0x10] sm:$0xf]
    %v382 = vld [vmem:[#allocation8 + $0x14] sm:$0xf]
    %v383 = vld [vmem:[#allocation8 + $0x18] sm:$0xf]
    %v384 = vld [vmem:[#allocation8 + $0x1c] sm:$0xf]
    %v385 = vld [vmem:[#allocation8 + $0x20] sm:$0xf]
    %v386 = vld [vmem:[#allocation8 + $0x24] sm:$0xf]
    %v387 = vld [vmem:[#allocation8 + $0x28] sm:$0xf]
    %v388 = vld [vmem:[#allocation8 + $0x2c] sm:$0xf]
    %v389 = vld [vmem:[#allocation8 + $0x30] sm:$0xf]
    %v390 = vld [vmem:[#allocation8 + $0x34] sm:$0xf]
    %v391 = vld [vmem:[#allocation8 + $0x38] sm:$0xf]
    %v392 = vld [vmem:[#allocation8 + $0x3c] sm:$0xf]
    %v393 = vld [vmem:[#allocation8 + $0x40] sm:$0xf]
    %v394 = vld [vmem:[#allocation8 + $0x44] sm:$0xf]
    %v395 = vld [vmem:[#allocation8 + $0x48] sm:$0xf]
    %v396 = vld [vmem:[#allocation8 + $0x4c] sm:$0xf]
    %v397 = vld [vmem:[#allocation8 + $0x50] sm:$0xf]
    %v398 = vld [vmem:[#allocation8 + $0x54] sm:$0xf]
    %v399 = vld [vmem:[#allocation8 + $0x58] sm:$0xf]
    %v400 = vld [vmem:[#allocation8 + $0x5c] sm:$0xf]
    %v401 = vld [vmem:[#allocation8 + $0x60] sm:$0xf]
    %v402 = vld [vmem:[#allocation8 + $0x64] sm:$0xf]
    %v403 = vld [vmem:[#allocation8 + $0x68] sm:$0xf]
    %v404 = vld [vmem:[#allocation8 + $0x6c] sm:$0xf]
    %v405 = vld [vmem:[#allocation8 + $0x70] sm:$0xf]
    %v406 = vld [vmem:[#allocation8 + $0x74] sm:$0xf]
    %v407 = vld [vmem:[#allocation8 + $0x78] sm:$0xf]
    %v408 = vld [vmem:[#allocation8 + $0x7c] sm:$0xf]
    %v441 = vunpack.c.l.b16 %v377
    %v442 = vunpack.c.l.b16 %v378
    %v443 = vunpack.c.l.b16 %v379
    %v444 = vunpack.c.l.b16 %v380
    %v445 = vunpack.c.l.b16 %v381
    %v446 = vunpack.c.l.b16 %v382
    %v447 = vunpack.c.l.b16 %v383
    %v448 = vunpack.c.l.b16 %v384
    %v449 = vunpack.c.l.b16 %v385
    %v450 = vunpack.c.l.b16 %v386
    %v451 = vunpack.c.l.b16 %v387
    %v452 = vunpack.c.l.b16 %v388
    %v453 = vunpack.c.l.b16 %v389
    %v454 = vunpack.c.l.b16 %v390
    %v455 = vunpack.c.l.b16 %v391
    %v456 = vunpack.c.l.b16 %v392
    %v457 = vunpack.c.l.b16 %v393
    %v458 = vunpack.c.l.b16 %v394
    %v459 = vunpack.c.l.b16 %v395
    %v460 = vunpack.c.l.b16 %v396
    %v461 = vunpack.c.l.b16 %v397
    %v462 = vunpack.c.l.b16 %v398
    %v463 = vunpack.c.l.b16 %v399
    %v464 = vunpack.c.l.b16 %v400
    %v465 = vunpack.c.l.b16 %v401
    %v466 = vunpack.c.l.b16 %v402
    %v467 = vunpack.c.l.b16 %v403
    %v468 = vunpack.c.l.b16 %v404
    %v469 = vunpack.c.l.b16 %v405
    %v470 = vunpack.c.l.b16 %v406
    %v471 = vunpack.c.l.b16 %v407
    %v472 = vunpack.c.l.b16 %v408
    %v473 = vpack.c.b16 %v442, %v441
    %v474 = vpack.c.b16 %v444, %v443
    %v475 = vpack.c.b16 %v446, %v445
    %v476 = vpack.c.b16 %v448, %v447
    %v477 = vpack.c.b16 %v450, %v449
    %v478 = vpack.c.b16 %v452, %v451
    %v479 = vpack.c.b16 %v454, %v453
    %v480 = vpack.c.b16 %v456, %v455
    %v481 = vpack.c.b16 %v458, %v457
    %v482 = vpack.c.b16 %v460, %v459
    %v483 = vpack.c.b16 %v462, %v461
    %v484 = vpack.c.b16 %v464, %v463
    %v485 = vpack.c.b16 %v466, %v465
    %v486 = vpack.c.b16 %v468, %v467
    %v487 = vpack.c.b16 %v470, %v469
    %v488 = vpack.c.b16 %v472, %v471
    %505 = vmatprep.subr.bf16.mxu0 0
    %506 = vmatpush1.bf16.msra.mxu0 %v480
    %507 = vmatprep.subr.bf16.mxu0 0
    %508 = vmatpush1.bf16.msra.mxu0 %v479
    %509 = vmatprep.subr.bf16.mxu0 0
    %510 = vmatpush1.bf16.msra.mxu0 %v478
    %511 = vmatprep.subr.bf16.mxu0 0
    %512 = vmatpush1.bf16.msra.mxu0 %v477
    %513 = vmatprep.subr.bf16.mxu0 0
    %514 = vmatpush1.bf16.msra.mxu0 %v476
    %515 = vmatprep.subr.bf16.mxu0 0
    %516 = vmatpush1.bf16.msra.mxu0 %v475
    %517 = vmatprep.subr.bf16.mxu0 0
    %518 = vmatpush1.bf16.msra.mxu0 %v474
    %519 = vmatprep.subr.bf16.mxu0 0
    %520 = vmatpush1.bf16.msra.mxu0 %v473
    %521 = vmatprep.subr.bf16.mxu0 0
    %522 = vmatpush2.bf16.msra.mxu0 %v488
    %523 = vmatprep.subr.bf16.mxu0 0
    %524 = vmatpush2.bf16.msra.mxu0 %v487
    %525 = vmatprep.subr.bf16.mxu0 0
    %526 = vmatpush2.bf16.msra.mxu0 %v486
    %527 = vmatprep.subr.bf16.mxu0 0
    %528 = vmatpush2.bf16.msra.mxu0 %v485
    %529 = vmatprep.subr.bf16.mxu0 0
    %530 = vmatpush2.bf16.msra.mxu0 %v484
    %531 = vmatprep.subr.bf16.mxu0 0
    %532 = vmatpush2.bf16.msra.mxu0 %v483
    %533 = vmatprep.subr.bf16.mxu0 0
    %534 = vmatpush2.bf16.msra.mxu0 %v482
    %535 = vmatprep.subr.bf16.mxu0 0
    %536 = vmatpush2.bf16.msra.mxu0 %v481
    %537 = vmatprep.mubr.bf16.mxu0 %v376
    %538 = vmatmul.mubr.bf16.gmra.mxu0 %v375
    %v539 = vpop.f32.mrf.mxu0
    %v540 = vadd.f32 0.0, %v539
    %v541 = vpop.f32.mrf.mxu0
    %v542 = vpop.f32.mrf.mxu0
    %v543 = vadd.f32 0.0, %v542
    %v544 = vpop.f32.mrf.mxu0
    %545 = vdwg.mxu0
    %p546 = scmp.eq.s32.totalorder 0, 0
    // Predicated region
    $region26: #{_apply.1} parent=1 // pred_check
      %p547 = pneg %p546
    $region27: #{_apply.1} parent=1 // pred_check_branch
      %549 = sbr.rel (%p547) target = $region29
    $region28: #{_apply.1} parent=1 // pred_region
      %550 = vst [vmem:[#allocation2] sm:$0xff] %v540
      %551 = vst [vmem:[#allocation2 + $0x8] sm:$0xff] %v543
    $region29: #{_apply.1} parent=1 // pred_fallthru
      _
    %p552 = scmp.gt.s32.totalorder 0, 0
    // Predicated region
    $region30: #{_apply.1} parent=1 // pred_check
      %p553 = pneg %p552
    $region31: #{_apply.1} parent=1 // pred_check_branch
      %555 = sbr.rel (%p553) target = $region33
    $region32: #{_apply.1} parent=1 // pred_region
      %v556 = vld [vmem:[#allocation2] sm:$0xff]
      %v557 = vld [vmem:[#allocation2 + $0x8] sm:$0xff]
      %v558 = vadd.f32 %v556, %v540
      %v559 = vadd.f32 %v557, %v543
      %560 = vst [vmem:[#allocation2] sm:$0xff] %v558
      %561 = vst [vmem:[#allocation2 + $0x8] sm:$0xff] %v559
    $region33: #{_apply.1} parent=1 // pred_fallthru
      _
    // Predicated region
    $region34: #{_apply.1} parent=1 // pred_check
      %p562 = pneg %p546
    $region35: #{_apply.1} parent=1 // pred_check_branch
      %564 = sbr.rel (%p562) target = $region37
    $region36: #{_apply.1} parent=1 // pred_region
      %v565 = vld [vmem:[#allocation2] sm:$0xff]
      %v566 = vld [vmem:[#allocation2 + $0x8] sm:$0xff]
      %v567 = vpack.c.bf16 %v566, %v565
      %v569 = vunpack.c.l.b16 %v567
      %v570 = vunpack.c.h.b16 %v567
      %v571 = vpack.c.b16 %v569, %v569
      %v572 = vpack.c.b16 %v570, %v570
      %575 = vst [vmem:[#allocation9] sm:$0xf] %v571
      %576 = vst [vmem:[#allocation9 + $0x4] sm:$0xf] %v572
    $region37: #{_apply.1} parent=1 // pred_fallthru
      _
    // Predicated region
    $region38: #{_apply.1} parent=1 // pred_check
      _
    $region39: #{_apply.1} parent=1 // pred_check_branch
      %578 = sbr.rel (0) target = $region41
    $region40: #{_apply.1} parent=1 // pred_region
      %s580 = ssub.s32 128, 128
      %581 = vsyncadd [#allocation5], %s580
      %s582 = sshll.u32 [#allocation9], 4
      %s583 = int_to_ptr.vmem [resolvable:$true] %s582
      %588 = dma.vmem_to_hbm [thread:$0]  %s583, 128, %s3, [#allocation5], 64, 64, 4
    $region41: #{_apply.1} parent=1 // pred_fallthru
      _
    // Predicated region
    $region42: #{_apply.1} parent=1 // pred_check
      _
    $region43: #{_apply.1} parent=1 // pred_check_branch
      %590 = sbr.rel (0) target = $region45
    $region44: #{_apply.1} parent=1 // pred_region
      %591 = dma.done [#allocation5], 128
    $region45: #{_apply.1} parent=1 // pred_fallthru
      _
    %592 = vsyncpa [#allocation4], 1
    %593 = vsyncpa [#allocation7], 1
    %594 = vsyncpa [#allocation5], 1

</llo_original>
